<compile_context>
chip_gen: v7x
topology: tpu7x:2x2x1
jax: 0.10.0
libtpu: 0.0.40
codegen_flags: <defaults>
</compile_context>

<pallas_src>
import functools

import jax
import jax.numpy as jnp
from jax.experimental import pallas as pl
from jax.experimental.pallas import tpu as pltpu

INPUT_SIZE = 30
HIDDEN_SIZE = 500
NUM_CLASSES = 2
NEG_SLOPE = 0.02

# Padded (TPU-friendly) dims.
IN_PAD = 32      # 30 -> 32   (lane-aligned K; block == full array dim, legal)
HID_PAD = 512    # 500 -> 512 (4 x 128 lanes, full vregs)
OUT_PAD = 128    # 2 -> 128   (lane-dense output -> unmasked vst)

MIN_TILE = 16    # batch-tile granule (bf16 out sublane packing, f32 (8,·) rule)


def _round_up(x, m):
    return (x + m - 1) // m * m


def _mlp_kernel(x_ref, w1_ref, b1_ref, w2_ref, b2_ref, o_ref):
    # In-kernel bf16 cast of the activations (free VPU filler; kernel is
    # memory-bound, not VALU-bound).
    x = x_ref[...].astype(jnp.bfloat16)
    # fc1: [TB, 32]bf16 @ [32, 512]bf16 -> f32 accumulator
    h = jnp.dot(x, w1_ref[...], preferred_element_type=jnp.float32)
    h = h + b1_ref[...]                        # bias add in f32
    h = jnp.where(h > 0, h, NEG_SLOPE * h)     # LeakyReLU(0.02) in f32
    # fc2: [TB, 512]bf16 @ [512, 128]bf16 -> f32 accumulator
    out = jnp.dot(h.astype(jnp.bfloat16), w2_ref[...],
                  preferred_element_type=jnp.float32)
    # bf16 store (halves output HBM writeback); wrapper restores f32.
    o_ref[...] = (out + b2_ref[...]).astype(o_ref.dtype)


def prepare_params(w1, b1, w2, b2):
    """Pad + cast the weights ONCE (outside the hot per-forward path).

    w1: [30, 500] f32 (already transposed vs. PyTorch's [out, in])
    b1: [500]     f32
    w2: [500, 2]  f32
    b2: [2]       f32
    Zero padding is mathematically inert.
    """
    w1_p = jnp.zeros((IN_PAD, HID_PAD), jnp.bfloat16)
    w1_p = w1_p.at[:INPUT_SIZE, :HIDDEN_SIZE].set(w1.astype(jnp.bfloat16))
    b1_p = jnp.zeros((1, HID_PAD), jnp.float32)
    b1_p = b1_p.at[0, :HIDDEN_SIZE].set(b1.reshape(-1))

    w2_p = jnp.zeros((HID_PAD, OUT_PAD), jnp.bfloat16)
    w2_p = w2_p.at[:HIDDEN_SIZE, :NUM_CLASSES].set(w2.astype(jnp.bfloat16))
    b2_p = jnp.zeros((1, OUT_PAD), jnp.float32)
    b2_p = b2_p.at[0, :NUM_CLASSES].set(b2.reshape(-1))
    return w1_p, b1_p, w2_p, b2_p


@functools.partial(jax.jit, static_argnames=("block_b",))
def neural_net_forward(x, w1_p, b1_p, w2_p, b2_p, *, block_b=1024):
    """Forward pass. Takes PRE-PADDED params from `prepare_params`.

    x: [B, 30] f32   ->   returns [B, 2] f32
    """
    B = x.shape[0]

    # --- batch-tile selection (all static under jit) ---
    tb = min(block_b, _round_up(B, MIN_TILE))
    if B >= 2 * MIN_TILE:
        # Guarantee >= 2 grid steps so the 'parallel' batch axis can shard
        # across v7x's two TensorCores (no effect on v5e/v6e: 1 TC).
        tb = min(tb, _round_up(pl.cdiv(B, 2), MIN_TILE))
    tb = max(MIN_TILE, _round_up(tb, MIN_TILE))
    b_pad = _round_up(B, tb)

    # Activations stay f32; single zero-pad (batch + lane), cast happens
    # inside the kernel. Padded rows/cols are inert and sliced off below.
    x_p = jnp.pad(x, ((0, b_pad - B), (0, IN_PAD - INPUT_SIZE)))

    grid = (b_pad // tb,)

    out_padded = pl.pallas_call(
        _mlp_kernel,
        out_shape=jax.ShapeDtypeStruct((b_pad, OUT_PAD), jnp.bfloat16),
        grid_spec=pltpu.PrefetchScalarGridSpec(
            num_scalar_prefetch=0,
            grid=grid,
            in_specs=[
                pl.BlockSpec((tb, IN_PAD), lambda i: (i, 0)),        # x tile
                pl.BlockSpec((IN_PAD, HID_PAD), lambda i: (0, 0)),   # w1 resident
                pl.BlockSpec((1, HID_PAD), lambda i: (0, 0)),        # b1 resident
                pl.BlockSpec((HID_PAD, OUT_PAD), lambda i: (0, 0)),  # w2 resident
                pl.BlockSpec((1, OUT_PAD), lambda i: (0, 0)),        # b2 resident
            ],
            out_specs=pl.BlockSpec((tb, OUT_PAD), lambda i: (i, 0)),
        ),
        compiler_params=pltpu.CompilerParams(
            dimension_semantics=("parallel",),
        ),
    )(x_p, w1_p, b1_p, w2_p, b2_p)

    # Slice away batch / lane padding and restore f32 (free layout plumbing).
    return out_padded[:B, :NUM_CLASSES].astype(jnp.float32)


def init_params(key):
    """Deterministic init mimicking PyTorch nn.Linear default (U[-1/sqrt(fan_in), +])."""
    k1, k2, k3, k4 = jax.random.split(key, 4)
    bound1 = 1.0 / jnp.sqrt(jnp.float32(INPUT_SIZE))
    bound2 = 1.0 / jnp.sqrt(jnp.float32(HIDDEN_SIZE))
    # Stored as [in, out] (transpose of PyTorch's [out, in]) for direct matmul.
    w1 = jax.random.uniform(k1, (INPUT_SIZE, HIDDEN_SIZE), jnp.float32,
                            -bound1, bound1)
    b1 = jax.random.uniform(k2, (HIDDEN_SIZE,), jnp.float32, -bound1, bound1)
    w2 = jax.random.uniform(k3, (HIDDEN_SIZE, NUM_CLASSES), jnp.float32,
                            -bound2, bound2)
    b2 = jax.random.uniform(k4, (NUM_CLASSES,), jnp.float32, -bound2, bound2)
    return w1, b1, w2, b2


if __name__ == "__main__":
    key = jax.random.PRNGKey(0)
    kx, kp = jax.random.split(key)

    batch = 8
    x = jax.random.normal(kx, (batch, INPUT_SIZE), jnp.float32)
    w1, b1, w2, b2 = init_params(kp)

    # Pad/cast weights once; reuse across forwards (no per-call weight plumbing).
    w1_p, b1_p, w2_p, b2_p = prepare_params(w1, b1, w2, b2)

    out = neural_net_forward(x, w1_p, b1_p, w2_p, b2_p)
    out = jax.block_until_ready(out)

    # Reference (plain-JAX f32, same math as the PyTorch module).
    h_ref = x @ w1 + b1[None, :]
    h_ref = jnp.where(h_ref > 0, h_ref, NEG_SLOPE * h_ref)
    ref = h_ref @ w2 + b2[None, :]

    assert out.shape == (batch, NUM_CLASSES)
    # bf16 MXU operands + bf16 output store with f32 accumulation -> small
    # relative error vs the f32 reference (deliberate tradeoff).
    assert jnp.allclose(out, ref, atol=5e-2, rtol=5e-2), (
        float(jnp.max(jnp.abs(out - ref))))

    print("KERNEL_OK")
</pallas_src>

<mosaic_0001>
module attributes {stable_mosaic.version = 11 : i64} {
  func.func @_mlp_kernel(%arg0: i32, %arg1: memref<16x32xf32, #tpu.memory_space<vmem>>, %arg2: memref<32x512xbf16, #tpu.memory_space<vmem>>, %arg3: memref<1x512xf32, #tpu.memory_space<vmem>>, %arg4: memref<512x128xbf16, #tpu.memory_space<vmem>>, %arg5: memref<1x128xf32, #tpu.memory_space<vmem>>, %arg6: memref<16x128xbf16, #tpu.memory_space<vmem>>) attributes {dimension_semantics = [#tpu.dimension_semantics<parallel>], iteration_bounds = array<i64: 1>, scalar_prefetch = 0 : i64, scratch_operands = 0 : i64, tpu.core_type = #tpu.core_type<tc>, window_params = [{transform_indices = @transform_0, window_bounds = array<i64: 16, 32>}, {pipeline_mode = #tpu.pipeline_mode<synchronous>, transform_indices = @transform_1, window_bounds = array<i64: 32, 512>}, {pipeline_mode = #tpu.pipeline_mode<synchronous>, transform_indices = @transform_2, window_bounds = array<i64: 1, 512>}, {pipeline_mode = #tpu.pipeline_mode<synchronous>, transform_indices = @transform_3, window_bounds = array<i64: 512, 128>}, {pipeline_mode = #tpu.pipeline_mode<synchronous>, transform_indices = @transform_4, window_bounds = array<i64: 1, 128>}, {transform_indices = @transform_5, window_bounds = array<i64: 16, 128>}]} {
    %c0 = arith.constant 0 : index
    %c0_0 = arith.constant 0 : index
    %0 = vector.load %arg1[%c0, %c0_0] : memref<16x32xf32, #tpu.memory_space<vmem>>, vector<16x32xf32>
    %1 = arith.truncf %0 : vector<16x32xf32> to vector<16x32xbf16>
    %c0_1 = arith.constant 0 : index
    %c0_2 = arith.constant 0 : index
    %2 = vector.load %arg2[%c0_1, %c0_2] : memref<32x512xbf16, #tpu.memory_space<vmem>>, vector<32x512xbf16>
    %cst = arith.constant dense<0.000000e+00> : vector<16x512xf32>
    %3 = tpu.matmul %1, %2, %cst {dimension_numbers = #tpu.dot_dimension_numbers<[1], [0], [0], [1], [0, 0, 1, 1], [], []>} : vector<16x32xbf16>, vector<32x512xbf16>, vector<16x512xf32> -> vector<16x512xf32>
    %c0_3 = arith.constant 0 : index
    %c0_4 = arith.constant 0 : index
    %4 = vector.load %arg3[%c0_3, %c0_4] : memref<1x512xf32, #tpu.memory_space<vmem>>, vector<1x512xf32>
    %5 = vector.broadcast %4 : vector<1x512xf32> to vector<16x512xf32>
    %6 = arith.addf %3, %5 : vector<16x512xf32>
    %cst_5 = arith.constant 0.000000e+00 : f32
    %7 = vector.broadcast %cst_5 : f32 to vector<16x512xf32>
    %8 = arith.cmpf ogt, %6, %7 : vector<16x512xf32>
    %cst_6 = arith.constant 2.000000e-02 : f32
    %9 = vector.broadcast %cst_6 : f32 to vector<16x512xf32>
    %10 = arith.mulf %9, %6 : vector<16x512xf32>
    %11 = arith.select %8, %6, %10 : vector<16x512xi1>, vector<16x512xf32>
    %12 = arith.truncf %11 : vector<16x512xf32> to vector<16x512xbf16>
    %c0_7 = arith.constant 0 : index
    %c0_8 = arith.constant 0 : index
    %13 = vector.load %arg4[%c0_7, %c0_8] : memref<512x128xbf16, #tpu.memory_space<vmem>>, vector<512x128xbf16>
    %cst_9 = arith.constant dense<0.000000e+00> : vector<16x128xf32>
    %14 = tpu.matmul %12, %13, %cst_9 {dimension_numbers = #tpu.dot_dimension_numbers<[1], [0], [0], [1], [0, 0, 1, 1], [], []>} : vector<16x512xbf16>, vector<512x128xbf16>, vector<16x128xf32> -> vector<16x128xf32>
    %c0_10 = arith.constant 0 : index
    %c0_11 = arith.constant 0 : index
    %15 = vector.load %arg5[%c0_10, %c0_11] : memref<1x128xf32, #tpu.memory_space<vmem>>, vector<1x128xf32>
    %16 = vector.broadcast %15 : vector<1x128xf32> to vector<16x128xf32>
    %17 = arith.addf %14, %16 : vector<16x128xf32>
    %18 = arith.truncf %17 : vector<16x128xf32> to vector<16x128xbf16>
    %c0_12 = arith.constant 0 : index
    %c0_13 = arith.constant 0 : index
    %19 = vector.load %arg6[%c0_12, %c0_13] : memref<16x128xbf16, #tpu.memory_space<vmem>>, vector<16x128xbf16>
    tpu.vector_store %arg6[%c0_12, %c0_13], %18 {strides = array<i32>} : memref<16x128xbf16, #tpu.memory_space<vmem>>, vector<16x128xbf16>,
    return
  }
  func.func @transform_0(%arg0: i32) -> (i32, i32) {
    %c0_i32 = arith.constant 0 : i32
    %c0_i32_0 = arith.constant 0 : i32
    return %arg0, %c0_i32 : i32, i32
  }
  func.func @transform_1(%arg0: i32) -> (i32, i32) {
    %c0_i32 = arith.constant 0 : i32
    %c0_i32_0 = arith.constant 0 : i32
    %c0_i32_1 = arith.constant 0 : i32
    return %c0_i32, %c0_i32_0 : i32, i32
  }
  func.func @transform_2(%arg0: i32) -> (i32, i32) {
    %c0_i32 = arith.constant 0 : i32
    %c0_i32_0 = arith.constant 0 : i32
    %c0_i32_1 = arith.constant 0 : i32
    return %c0_i32, %c0_i32_0 : i32, i32
  }
  func.func @transform_3(%arg0: i32) -> (i32, i32) {
    %c0_i32 = arith.constant 0 : i32
    %c0_i32_0 = arith.constant 0 : i32
    %c0_i32_1 = arith.constant 0 : i32
    return %c0_i32, %c0_i32_0 : i32, i32
  }
  func.func @transform_4(%arg0: i32) -> (i32, i32) {
    %c0_i32 = arith.constant 0 : i32
    %c0_i32_0 = arith.constant 0 : i32
    %c0_i32_1 = arith.constant 0 : i32
    return %c0_i32, %c0_i32_0 : i32, i32
  }
  func.func @transform_5(%arg0: i32) -> (i32, i32) {
    %c0_i32 = arith.constant 0 : i32
    %c0_i32_0 = arith.constant 0 : i32
    return %arg0, %c0_i32 : i32, i32
  }
}

</mosaic_0001>

<llo_original>
// kernel: neural_net_forward.1
$region0: #{neural_net_forward.1}
  #allocation0 [shape = 'u32[]', space=smem, size = 0x4, offset = 0x4, fixed_abs, tag = 'smem constant byte address 0x4 - core index']
  #allocation1 [shape = 'u32[144,128]{1,0:T(1,128)}', space=vmem, size = 0x12000, scoped, tag = 'internal scratch']
  %s0 = inlined_call_operand.vmem [shape: f32[16,32], index: 0, kind: input, shape index: {}]
  %s1 = inlined_call_operand.hbm [shape: bf16[32,512], index: 1, kind: input, shape index: {}]
  %s2 = inlined_call_operand.vmem [shape: f32[1,512], index: 2, kind: input, shape index: {}]
  %s3 = inlined_call_operand.hbm [shape: bf16[512,128], index: 3, kind: input, shape index: {}]
  %s4 = inlined_call_operand.vmem [shape: f32[1,128], index: 4, kind: input, shape index: {}]
  %s5 = inlined_call_operand.vmem [shape: bf16[16,128], index: 5, kind: output, shape index: {}]
  %s6 = sld [smem:[#allocation0]]
  $region38: #{neural_net_forward.1} parent=0
    _
  %s8 = ssub.s32 1, %s6
  %s9 = scalar_select 0, %s8, %s6
  $region1: #{neural_net_forward.1} parent=0
    #allocation2 [shape = 'u8[32768]{0}', space=vmem, size = 0x8000, scoped, tag = 'input window, operand 1, single buffered']
    #allocation3 [shape = 's32[1]{0}', space=sflag, size = 0x4, scoped, tag = 'scoped memory for neural_net_forward.1']
    #allocation4 [shape = 'u8[131072]{0}', space=vmem, size = 0x20000, scoped, tag = 'input window, operand 3, single buffered']
    #allocation5 [shape = 's32[1]{0}', space=sflag, size = 0x4, scoped, tag = 'scoped memory for neural_net_forward.1']
    %10 = vsyncpa [#allocation3], 0
    %11 = vsyncpa [#allocation5], 0
    // Predicated region
    $region2: #{neural_net_forward.1} parent=1 // pred_check
      _
    $region3: #{neural_net_forward.1} parent=1 // pred_check_branch
      %13 = sbr.rel (0) target = $region5
    $region4: #{neural_net_forward.1} parent=1 // pred_region
      _
    $region5: #{neural_net_forward.1} parent=1 // pred_fallthru
      _
    // Predicated region
    $region6: #{neural_net_forward.1} parent=1 // pred_check
      _
    $region7: #{neural_net_forward.1} parent=1 // pred_check_branch
      %15 = sbr.rel (0) target = $region9
    $region8: #{neural_net_forward.1} parent=1 // pred_region
      %s17 = ssub.s32 1024, 1024
      %18 = vsyncadd [#allocation3], %s17
      %s19 = sshll.u32 [#allocation2], 4
      %s20 = int_to_ptr.vmem [resolvable:$true] %s19
      %25 = dma.hbm_to_vmem [thread:$0]  %s1, 1024, %s20, [#allocation3], 256, 256, 16
    $region9: #{neural_net_forward.1} parent=1 // pred_fallthru
      _
    // Predicated region
    $region10: #{neural_net_forward.1} parent=1 // pred_check
      _
    $region11: #{neural_net_forward.1} parent=1 // pred_check_branch
      %27 = sbr.rel (0) target = $region13
    $region12: #{neural_net_forward.1} parent=1 // pred_region
      _
    $region13: #{neural_net_forward.1} parent=1 // pred_fallthru
      _
    // Predicated region
    $region14: #{neural_net_forward.1} parent=1 // pred_check
      _
    $region15: #{neural_net_forward.1} parent=1 // pred_check_branch
      %29 = sbr.rel (0) target = $region17
    $region16: #{neural_net_forward.1} parent=1 // pred_region
      %s31 = ssub.s32 4096, 4096
      %32 = vsyncadd [#allocation5], %s31
      %s33 = sshll.u32 [#allocation4], 4
      %s34 = int_to_ptr.vmem [resolvable:$true] %s33
      %39 = dma.hbm_to_vmem [thread:$0]  %s3, 4096, %s34, [#allocation5], 64, 64, 4
    $region17: #{neural_net_forward.1} parent=1 // pred_fallthru
      _
    // Predicated region
    $region18: #{neural_net_forward.1} parent=1 // pred_check
      _
    $region19: #{neural_net_forward.1} parent=1 // pred_check_branch
      %41 = sbr.rel (0) target = $region21
    $region20: #{neural_net_forward.1} parent=1 // pred_region
      _
    $region21: #{neural_net_forward.1} parent=1 // pred_fallthru
      _
    // Predicated region
    $region22: #{neural_net_forward.1} parent=1 // pred_check
      _
    $region23: #{neural_net_forward.1} parent=1 // pred_check_branch
      %43 = sbr.rel (0) target = $region25
    $region24: #{neural_net_forward.1} parent=1 // pred_region
      %44 = dma.done [#allocation3], 1024
    $region25: #{neural_net_forward.1} parent=1 // pred_fallthru
      _
    // Predicated region
    $region26: #{neural_net_forward.1} parent=1 // pred_check
      _
    $region27: #{neural_net_forward.1} parent=1 // pred_check_branch
      %46 = sbr.rel (0) target = $region29
    $region28: #{neural_net_forward.1} parent=1 // pred_region
      %47 = dma.done [#allocation5], 4096
    $region29: #{neural_net_forward.1} parent=1 // pred_fallthru
      _
    %v49 = vld [vmem:[%s0] sm:$0xff]
    %v50 = vld [vmem:[%s0 + $0x8] sm:$0xff]
    %v51 = vpack.c.bf16 %v50, %v49
    %v52 = vld [vmem:[#allocation2] sm:$0xff]
    %v53 = vld [vmem:[#allocation2 + $0x8] sm:$0xff]
    %v54 = vld [vmem:[#allocation2 + $0x10] sm:$0xff]
    %v55 = vld [vmem:[#allocation2 + $0x18] sm:$0xff]
    %v56 = vld [vmem:[#allocation2 + $0x20] sm:$0xff]
    %v57 = vld [vmem:[#allocation2 + $0x28] sm:$0xff]
    %v58 = vld [vmem:[#allocation2 + $0x30] sm:$0xff]
    %v59 = vld [vmem:[#allocation2 + $0x38] sm:$0xff]
    %v60 = vld [vmem:[%s2] sm:$0xf]
    %v62 = vlaneseq
    %v63 = vshrl.u32 %v62, 7
    %v64 = vsub.s32 0, %v63
    %v65 = vrot.slane %v60, %v64
    %v66 = vlaneseq
    %v67 = vshrl.u32 %v66, 7
    %v68 = vsub.s32 1, %v67
    %v69 = vrot.slane %v60, %v68
    %v70 = vlaneseq
    %v71 = vshrl.u32 %v70, 7
    %v72 = vsub.s32 2, %v71
    %v73 = vrot.slane %v60, %v72
    %v74 = vlaneseq
    %v75 = vshrl.u32 %v74, 7
    %v76 = vsub.s32 3, %v75
    %v77 = vrot.slane %v60, %v76
    %v90 = vunpack.c.l.b16 %v52
    %v91 = vunpack.c.h.b16 %v52
    %v92 = vunpack.c.l.b16 %v53
    %v93 = vunpack.c.h.b16 %v53
    %v94 = vunpack.c.l.b16 %v54
    %v95 = vunpack.c.h.b16 %v54
    %v96 = vunpack.c.l.b16 %v55
    %v97 = vunpack.c.h.b16 %v55
    %v98 = vunpack.c.l.b16 %v56
    %v99 = vunpack.c.h.b16 %v56
    %v100 = vunpack.c.l.b16 %v57
    %v101 = vunpack.c.h.b16 %v57
    %v102 = vunpack.c.l.b16 %v58
    %v103 = vunpack.c.h.b16 %v58
    %v104 = vunpack.c.l.b16 %v59
    %v105 = vunpack.c.h.b16 %v59
    %v106 = vpack.c.b16 %v94, %v90
    %v107 = vpack.c.b16 %v95, %v91
    %v108 = vpack.c.b16 %v96, %v92
    %v109 = vpack.c.b16 %v97, %v93
    %v110 = vpack.c.b16 %v102, %v98
    %v111 = vpack.c.b16 %v103, %v99
    %v112 = vpack.c.b16 %v104, %v100
    %v113 = vpack.c.b16 %v105, %v101
    %vm122 = vcmask 261120
    %v124 = vsel %vm122, %v51, 0
    %126 = vmatprep.subr.bf16.mxu0 %v107
    %127 = vmatpush1.bf16.msra.mxu0 %v106
    %128 = vmatprep.subr.bf16.mxu0 %v111
    %129 = vmatpush1.bf16.msra.mxu0 %v110
    %130 = vmatprep.subr.bf16.mxu0 0
    %131 = vmatpush1.bf16.msra.mxu0 0
    %132 = vmatprep.subr.bf16.mxu0 0
    %133 = vmatpush1.bf16.msra.mxu0 0
    %134 = vmatprep.subr.bf16.mxu0 0
    %135 = vmatpush1.bf16.msra.mxu0 0
    %136 = vmatprep.subr.bf16.mxu0 0
    %137 = vmatpush1.bf16.msra.mxu0 0
    %138 = vmatprep.subr.bf16.mxu0 0
    %139 = vmatpush1.bf16.msra.mxu0 0
    %140 = vmatprep.subr.bf16.mxu0 0
    %141 = vmatpush1.bf16.msra.mxu0 0
    %142 = vmatprep.subr.bf16.mxu0 0
    %143 = vmatpush1.bf16.msra.mxu0 0
    %144 = vmatprep.subr.bf16.mxu0 0
    %145 = vmatpush1.bf16.msra.mxu0 0
    %146 = vmatprep.subr.bf16.mxu0 0
    %147 = vmatpush1.bf16.msra.mxu0 0
    %148 = vmatprep.subr.bf16.mxu0 0
    %149 = vmatpush1.bf16.msra.mxu0 0
    %150 = vmatprep.subr.bf16.mxu0 0
    %151 = vmatpush1.bf16.msra.mxu0 0
    %152 = vmatprep.subr.bf16.mxu0 0
    %153 = vmatpush1.bf16.msra.mxu0 0
    %154 = vmatprep.subr.bf16.mxu0 0
    %155 = vmatpush1.bf16.msra.mxu0 0
    %156 = vmatprep.subr.bf16.mxu0 0
    %157 = vmatpush1.bf16.msra.mxu0 0
    %158 = vmatprep.mubr.bf16.mxu0 0
    %159 = vmatmul.mubr.bf16.gmra.mrb[0].mxu0 %v124
    %v160 = vpop.f32.mrb[0].mxu0
    %v161 = vadd.f32 %v65, %v160
    %v162 = vpop.f32.mrb[0].mxu0
    %v163 = vadd.f32 %v69, %v162
    %v164 = vpop.f32.mrb[0].mxu0
    %v165 = vadd.f32 %v65, %v164
    %v166 = vpop.f32.mrb[0].mxu0
    %v167 = vadd.f32 %v69, %v166
    %168 = vdwg.mxu0
    %169 = vmatprep.subr.bf16.mxu0 %v109
    %170 = vmatpush1.bf16.msra.mxu0 %v108
    %171 = vmatprep.subr.bf16.mxu0 %v113
    %172 = vmatpush1.bf16.msra.mxu0 %v112
    %173 = vmatprep.subr.bf16.mxu0 0
    %174 = vmatpush1.bf16.msra.mxu0 0
    %175 = vmatprep.subr.bf16.mxu0 0
    %176 = vmatpush1.bf16.msra.mxu0 0
    %177 = vmatprep.subr.bf16.mxu0 0
    %178 = vmatpush1.bf16.msra.mxu0 0
    %179 = vmatprep.subr.bf16.mxu0 0
    %180 = vmatpush1.bf16.msra.mxu0 0
    %181 = vmatprep.subr.bf16.mxu0 0
    %182 = vmatpush1.bf16.msra.mxu0 0
    %183 = vmatprep.subr.bf16.mxu0 0
    %184 = vmatpush1.bf16.msra.mxu0 0
    %185 = vmatprep.subr.bf16.mxu0 0
    %186 = vmatpush1.bf16.msra.mxu0 0
    %187 = vmatprep.subr.bf16.mxu0 0
    %188 = vmatpush1.bf16.msra.mxu0 0
    %189 = vmatprep.subr.bf16.mxu0 0
    %190 = vmatpush1.bf16.msra.mxu0 0
    %191 = vmatprep.subr.bf16.mxu0 0
    %192 = vmatpush1.bf16.msra.mxu0 0
    %193 = vmatprep.subr.bf16.mxu0 0
    %194 = vmatpush1.bf16.msra.mxu0 0
    %195 = vmatprep.subr.bf16.mxu0 0
    %196 = vmatpush1.bf16.msra.mxu0 0
    %197 = vmatprep.subr.bf16.mxu0 0
    %198 = vmatpush1.bf16.msra.mxu0 0
    %199 = vmatprep.subr.bf16.mxu0 0
    %200 = vmatpush1.bf16.msra.mxu0 0
    %201 = vmatprep.mubr.bf16.mxu0 0
    %202 = vmatmul.mubr.bf16.gmra.mrb[0].mxu0 %v124
    %v203 = vpop.f32.mrb[0].mxu0
    %v204 = vadd.f32 %v73, %v203
    %v205 = vpop.f32.mrb[0].mxu0
    %v206 = vadd.f32 %v77, %v205
    %v207 = vpop.f32.mrb[0].mxu0
    %v208 = vadd.f32 %v73, %v207
    %v209 = vpop.f32.mrb[0].mxu0
    %v210 = vadd.f32 %v77, %v209
    %211 = vdwg.mxu0
    %vm212 = vcmp.gt.f32.partialorder %v161, 0.0
    %vm213 = vcmp.gt.f32.partialorder %v163, 0.0
    %vm214 = vcmp.gt.f32.partialorder %v204, 0.0
    %vm215 = vcmp.gt.f32.partialorder %v206, 0.0
    %vm216 = vcmp.gt.f32.partialorder %v165, 0.0
    %vm217 = vcmp.gt.f32.partialorder %v167, 0.0
    %vm218 = vcmp.gt.f32.partialorder %v208, 0.0
    %vm219 = vcmp.gt.f32.partialorder %v210, 0.0
    %v220 = vmul.f32 %v161, 0.02
    %v221 = vmul.f32 %v163, 0.02
    %v222 = vmul.f32 %v204, 0.02
    %v223 = vmul.f32 %v206, 0.02
    %v224 = vmul.f32 %v165, 0.02
    %v225 = vmul.f32 %v167, 0.02
    %v226 = vmul.f32 %v208, 0.02
    %v227 = vmul.f32 %v210, 0.02
    %v228 = vsel %vm212, %v161, %v220
    %v229 = vsel %vm213, %v163, %v221
    %v230 = vsel %vm214, %v204, %v222
    %v231 = vsel %vm215, %v206, %v223
    %v232 = vsel %vm216, %v165, %v224
    %v233 = vsel %vm217, %v167, %v225
    %v234 = vsel %vm218, %v208, %v226
    %v235 = vsel %vm219, %v210, %v227
    %v236 = vpack.c.bf16 %v232, %v228
    %v237 = vpack.c.bf16 %v233, %v229
    %v238 = vpack.c.bf16 %v234, %v230
    %v239 = vpack.c.bf16 %v235, %v231
    %v240 = vld [vmem:[#allocation4] sm:$0xf]
    %v241 = vld [vmem:[#allocation4 + $0x4] sm:$0xf]
    %v242 = vld [vmem:[#allocation4 + $0x8] sm:$0xf]
    %v243 = vld [vmem:[#allocation4 + $0xc] sm:$0xf]
    %v244 = vld [vmem:[#allocation4 + $0x10] sm:$0xf]
    %v245 = vld [vmem:[#allocation4 + $0x14] sm:$0xf]
    %v246 = vld [vmem:[#allocation4 + $0x18] sm:$0xf]
    %v247 = vld [vmem:[#allocation4 + $0x1c] sm:$0xf]
    %v248 = vld [vmem:[#allocation4 + $0x20] sm:$0xf]
    %v249 = vld [vmem:[#allocation4 + $0x24] sm:$0xf]
    %v250 = vld [vmem:[#allocation4 + $0x28] sm:$0xf]
    %v251 = vld [vmem:[#allocation4 + $0x2c] sm:$0xf]
    %v252 = vld [vmem:[#allocation4 + $0x30] sm:$0xf]
    %v253 = vld [vmem:[#allocation4 + $0x34] sm:$0xf]
    %v254 = vld [vmem:[#allocation4 + $0x38] sm:$0xf]
    %v255 = vld [vmem:[#allocation4 + $0x3c] sm:$0xf]
    %v256 = vld [vmem:[#allocation4 + $0x40] sm:$0xf]
    %v257 = vld [vmem:[#allocation4 + $0x44] sm:$0xf]
    %v258 = vld [vmem:[#allocation4 + $0x48] sm:$0xf]
    %v259 = vld [vmem:[#allocation4 + $0x4c] sm:$0xf]
    %v260 = vld [vmem:[#allocation4 + $0x50] sm:$0xf]
    %v261 = vld [vmem:[#allocation4 + $0x54] sm:$0xf]
    %v262 = vld [vmem:[#allocation4 + $0x58] sm:$0xf]
    %v263 = vld [vmem:[#allocation4 + $0x5c] sm:$0xf]
    %v264 = vld [vmem:[#allocation4 + $0x60] sm:$0xf]
    %v265 = vld [vmem:[#allocation4 + $0x64] sm:$0xf]
    %v266 = vld [vmem:[#allocation4 + $0x68] sm:$0xf]
    %v267 = vld [vmem:[#allocation4 + $0x6c] sm:$0xf]
    %v268 = vld [vmem:[#allocation4 + $0x70] sm:$0xf]
    %v269 = vld [vmem:[#allocation4 + $0x74] sm:$0xf]
    %v270 = vld [vmem:[#allocation4 + $0x78] sm:$0xf]
    %v271 = vld [vmem:[#allocation4 + $0x7c] sm:$0xf]
    %v272 = vld [vmem:[#allocation4 + $0x80] sm:$0xf]
    %v273 = vld [vmem:[#allocation4 + $0x84] sm:$0xf]
    %v274 = vld [vmem:[#allocation4 + $0x88] sm:$0xf]
    %v275 = vld [vmem:[#allocation4 + $0x8c] sm:$0xf]
    %v276 = vld [vmem:[#allocation4 + $0x90] sm:$0xf]
    %v277 = vld [vmem:[#allocation4 + $0x94] sm:$0xf]
    %v278 = vld [vmem:[#allocation4 + $0x98] sm:$0xf]
    %v279 = vld [vmem:[#allocation4 + $0x9c] sm:$0xf]
    %v280 = vld [vmem:[#allocation4 + $0xa0] sm:$0xf]
    %v281 = vld [vmem:[#allocation4 + $0xa4] sm:$0xf]
    %v282 = vld [vmem:[#allocation4 + $0xa8] sm:$0xf]
    %v283 = vld [vmem:[#allocation4 + $0xac] sm:$0xf]
    %v284 = vld [vmem:[#allocation4 + $0xb0] sm:$0xf]
    %v285 = vld [vmem:[#allocation4 + $0xb4] sm:$0xf]
    %v286 = vld [vmem:[#allocation4 + $0xb8] sm:$0xf]
    %v287 = vld [vmem:[#allocation4 + $0xbc] sm:$0xf]
    %v288 = vld [vmem:[#allocation4 + $0xc0] sm:$0xf]
    %v289 = vld [vmem:[#allocation4 + $0xc4] sm:$0xf]
    %v290 = vld [vmem:[#allocation4 + $0xc8] sm:$0xf]
    %v291 = vld [vmem:[#allocation4 + $0xcc] sm:$0xf]
    %v292 = vld [vmem:[#allocation4 + $0xd0] sm:$0xf]
    %v293 = vld [vmem:[#allocation4 + $0xd4] sm:$0xf]
    %v294 = vld [vmem:[#allocation4 + $0xd8] sm:$0xf]
    %v295 = vld [vmem:[#allocation4 + $0xdc] sm:$0xf]
    %v296 = vld [vmem:[#allocation4 + $0xe0] sm:$0xf]
    %v297 = vld [vmem:[#allocation4 + $0xe4] sm:$0xf]
    %v298 = vld [vmem:[#allocation4 + $0xe8] sm:$0xf]
    %v299 = vld [vmem:[#allocation4 + $0xec] sm:$0xf]
    %v300 = vld [vmem:[#allocation4 + $0xf0] sm:$0xf]
    %v301 = vld [vmem:[#allocation4 + $0xf4] sm:$0xf]
    %v302 = vld [vmem:[#allocation4 + $0xf8] sm:$0xf]
    %v303 = vld [vmem:[#allocation4 + $0xfc] sm:$0xf]
    %v304 = vld [vmem:[%s4] sm:$0x1]
    %v306 = vlaneseq
    %v307 = vshrl.u32 %v306, 7
    %v308 = vsub.s32 0, %v307
    %v309 = vrot.slane %v304, %v308
    %v375 = vunpack.c.l.b16 %v240
    %v376 = vunpack.c.l.b16 %v241
    %v377 = vunpack.c.l.b16 %v242
    %v378 = vunpack.c.l.b16 %v243
    %v379 = vunpack.c.l.b16 %v244
    %v380 = vunpack.c.l.b16 %v245
    %v381 = vunpack.c.l.b16 %v246
    %v382 = vunpack.c.l.b16 %v247
    %v383 = vunpack.c.l.b16 %v248
    %v384 = vunpack.c.l.b16 %v249
    %v385 = vunpack.c.l.b16 %v250
    %v386 = vunpack.c.l.b16 %v251
    %v387 = vunpack.c.l.b16 %v252
    %v388 = vunpack.c.l.b16 %v253
    %v389 = vunpack.c.l.b16 %v254
    %v390 = vunpack.c.l.b16 %v255
    %v391 = vunpack.c.l.b16 %v256
    %v392 = vunpack.c.l.b16 %v257
    %v393 = vunpack.c.l.b16 %v258
    %v394 = vunpack.c.l.b16 %v259
    %v395 = vunpack.c.l.b16 %v260
    %v396 = vunpack.c.l.b16 %v261
    %v397 = vunpack.c.l.b16 %v262
    %v398 = vunpack.c.l.b16 %v263
    %v399 = vunpack.c.l.b16 %v264
    %v400 = vunpack.c.l.b16 %v265
    %v401 = vunpack.c.l.b16 %v266
    %v402 = vunpack.c.l.b16 %v267
    %v403 = vunpack.c.l.b16 %v268
    %v404 = vunpack.c.l.b16 %v269
    %v405 = vunpack.c.l.b16 %v270
    %v406 = vunpack.c.l.b16 %v271
    %v407 = vunpack.c.l.b16 %v272
    %v408 = vunpack.c.l.b16 %v273
    %v409 = vunpack.c.l.b16 %v274
    %v410 = vunpack.c.l.b16 %v275
    %v411 = vunpack.c.l.b16 %v276
    %v412 = vunpack.c.l.b16 %v277
    %v413 = vunpack.c.l.b16 %v278
    %v414 = vunpack.c.l.b16 %v279
    %v415 = vunpack.c.l.b16 %v280
    %v416 = vunpack.c.l.b16 %v281
    %v417 = vunpack.c.l.b16 %v282
    %v418 = vunpack.c.l.b16 %v283
    %v419 = vunpack.c.l.b16 %v284
    %v420 = vunpack.c.l.b16 %v285
    %v421 = vunpack.c.l.b16 %v286
    %v422 = vunpack.c.l.b16 %v287
    %v423 = vunpack.c.l.b16 %v288
    %v424 = vunpack.c.l.b16 %v289
    %v425 = vunpack.c.l.b16 %v290
    %v426 = vunpack.c.l.b16 %v291
    %v427 = vunpack.c.l.b16 %v292
    %v428 = vunpack.c.l.b16 %v293
    %v429 = vunpack.c.l.b16 %v294
    %v430 = vunpack.c.l.b16 %v295
    %v431 = vunpack.c.l.b16 %v296
    %v432 = vunpack.c.l.b16 %v297
    %v433 = vunpack.c.l.b16 %v298
    %v434 = vunpack.c.l.b16 %v299
    %v435 = vunpack.c.l.b16 %v300
    %v436 = vunpack.c.l.b16 %v301
    %v437 = vunpack.c.l.b16 %v302
    %v438 = vunpack.c.l.b16 %v303
    %v439 = vpack.c.b16 %v376, %v375
    %v440 = vpack.c.b16 %v378, %v377
    %v441 = vpack.c.b16 %v380, %v379
    %v442 = vpack.c.b16 %v382, %v381
    %v443 = vpack.c.b16 %v384, %v383
    %v444 = vpack.c.b16 %v386, %v385
    %v445 = vpack.c.b16 %v388, %v387
    %v446 = vpack.c.b16 %v390, %v389
    %v447 = vpack.c.b16 %v392, %v391
    %v448 = vpack.c.b16 %v394, %v393
    %v449 = vpack.c.b16 %v396, %v395
    %v450 = vpack.c.b16 %v398, %v397
    %v451 = vpack.c.b16 %v400, %v399
    %v452 = vpack.c.b16 %v402, %v401
    %v453 = vpack.c.b16 %v404, %v403
    %v454 = vpack.c.b16 %v406, %v405
    %v455 = vpack.c.b16 %v408, %v407
    %v456 = vpack.c.b16 %v410, %v409
    %v457 = vpack.c.b16 %v412, %v411
    %v458 = vpack.c.b16 %v414, %v413
    %v459 = vpack.c.b16 %v416, %v415
    %v460 = vpack.c.b16 %v418, %v417
    %v461 = vpack.c.b16 %v420, %v419
    %v462 = vpack.c.b16 %v422, %v421
    %v463 = vpack.c.b16 %v424, %v423
    %v464 = vpack.c.b16 %v426, %v425
    %v465 = vpack.c.b16 %v428, %v427
    %v466 = vpack.c.b16 %v430, %v429
    %v467 = vpack.c.b16 %v432, %v431
    %v468 = vpack.c.b16 %v434, %v433
    %v469 = vpack.c.b16 %v436, %v435
    %v470 = vpack.c.b16 %v438, %v437
    %503 = vmatprep.subr.bf16.mxu0 0
    %504 = vmatpush1.bf16.msra.mxu0 %v439
    %505 = vmatprep.subr.bf16.mxu0 0
    %506 = vmatpush1.bf16.msra.mxu0 %v440
    %507 = vmatprep.subr.bf16.mxu0 0
    %508 = vmatpush1.bf16.msra.mxu0 %v441
    %509 = vmatprep.subr.bf16.mxu0 0
    %510 = vmatpush1.bf16.msra.mxu0 %v442
    %511 = vmatprep.subr.bf16.mxu0 0
    %512 = vmatpush1.bf16.msra.mxu0 %v443
    %513 = vmatprep.subr.bf16.mxu0 0
    %514 = vmatpush1.bf16.msra.mxu0 %v444
    %515 = vmatprep.subr.bf16.mxu0 0
    %516 = vmatpush1.bf16.msra.mxu0 %v445
    %517 = vmatprep.subr.bf16.mxu0 0
    %518 = vmatpush1.bf16.msra.mxu0 %v446
    %519 = vmatprep.subr.bf16.mxu0 0
    %520 = vmatpush1.bf16.msra.mxu0 %v447
    %521 = vmatprep.subr.bf16.mxu0 0
    %522 = vmatpush1.bf16.msra.mxu0 %v448
    %523 = vmatprep.subr.bf16.mxu0 0
    %524 = vmatpush1.bf16.msra.mxu0 %v449
    %525 = vmatprep.subr.bf16.mxu0 0
    %526 = vmatpush1.bf16.msra.mxu0 %v450
    %527 = vmatprep.subr.bf16.mxu0 0
    %528 = vmatpush1.bf16.msra.mxu0 %v451
    %529 = vmatprep.subr.bf16.mxu0 0
    %530 = vmatpush1.bf16.msra.mxu0 %v452
    %531 = vmatprep.subr.bf16.mxu0 0
    %532 = vmatpush1.bf16.msra.mxu0 %v453
    %533 = vmatprep.subr.bf16.mxu0 0
    %534 = vmatpush1.bf16.msra.mxu0 %v454
    %535 = vmatprep.mubr.bf16.mxu0 %v237
    %536 = vmatmul.mubr.bf16.gmra.mrb[0].mxu0 %v236
    %v537 = vpop.f32.mrb[0].mxu0
    %v538 = vadd.f32 %v309, %v537
    %v539 = vpop.f32.mrb[0].mxu0
    %v540 = vpop.f32.mrb[0].mxu0
    %v541 = vadd.f32 %v309, %v540
    %v542 = vpop.f32.mrb[0].mxu0
    %543 = vdwg.mxu0
    %544 = vmatprep.subr.bf16.mxu0 0
    %545 = vmatpush1.bf16.msra.mxu0 %v455
    %546 = vmatprep.subr.bf16.mxu0 0
    %547 = vmatpush1.bf16.msra.mxu0 %v456
    %548 = vmatprep.subr.bf16.mxu0 0
    %549 = vmatpush1.bf16.msra.mxu0 %v457
    %550 = vmatprep.subr.bf16.mxu0 0
    %551 = vmatpush1.bf16.msra.mxu0 %v458
    %552 = vmatprep.subr.bf16.mxu0 0
    %553 = vmatpush1.bf16.msra.mxu0 %v459
    %554 = vmatprep.subr.bf16.mxu0 0
    %555 = vmatpush1.bf16.msra.mxu0 %v460
    %556 = vmatprep.subr.bf16.mxu0 0
    %557 = vmatpush1.bf16.msra.mxu0 %v461
    %558 = vmatprep.subr.bf16.mxu0 0
    %559 = vmatpush1.bf16.msra.mxu0 %v462
    %560 = vmatprep.subr.bf16.mxu0 0
    %561 = vmatpush1.bf16.msra.mxu0 %v463
    %562 = vmatprep.subr.bf16.mxu0 0
    %563 = vmatpush1.bf16.msra.mxu0 %v464
    %564 = vmatprep.subr.bf16.mxu0 0
    %565 = vmatpush1.bf16.msra.mxu0 %v465
    %566 = vmatprep.subr.bf16.mxu0 0
    %567 = vmatpush1.bf16.msra.mxu0 %v466
    %568 = vmatprep.subr.bf16.mxu0 0
    %569 = vmatpush1.bf16.msra.mxu0 %v467
    %570 = vmatprep.subr.bf16.mxu0 0
    %571 = vmatpush1.bf16.msra.mxu0 %v468
    %572 = vmatprep.subr.bf16.mxu0 0
    %573 = vmatpush1.bf16.msra.mxu0 %v469
    %574 = vmatprep.subr.bf16.mxu0 0
    %575 = vmatpush1.bf16.msra.mxu0 %v470
    %576 = vmatprep.mubr.bf16.mxu0 %v239
    %577 = vmatmul.mubr.bf16.gmra.mrb[0].mxu0 %v238
    %v578 = vpop.f32.mrb[0].mxu0
    %v579 = vadd.f32 %v538, %v578
    %v580 = vpop.f32.mrb[0].mxu0
    %v581 = vpop.f32.mrb[0].mxu0
    %v582 = vadd.f32 %v541, %v581
    %v583 = vpop.f32.mrb[0].mxu0
    %584 = vdwg.mxu0
    %v585 = vpack.c.bf16 %v582, %v579
    %v587 = vunpack.c.l.b16 %v585
    %v588 = vunpack.c.h.b16 %v585
    %v589 = vpack.c.b16 %v587, %v587
    %v590 = vpack.c.b16 %v588, %v588
    %593 = vst [vmem:[%s5] sm:$0xf] %v589
    %594 = vst [vmem:[%s5 + $0x4] sm:$0xf] %v590
    // Predicated region
    $region30: #{neural_net_forward.1} parent=1 // pred_check
      _
    $region31: #{neural_net_forward.1} parent=1 // pred_check_branch
      %596 = sbr.rel (0) target = $region33
    $region32: #{neural_net_forward.1} parent=1 // pred_region
      _
    $region33: #{neural_net_forward.1} parent=1 // pred_fallthru
      _
    // Predicated region
    $region34: #{neural_net_forward.1} parent=1 // pred_check
      _
    $region35: #{neural_net_forward.1} parent=1 // pred_check_branch
      %598 = sbr.rel (0) target = $region37
    $region36: #{neural_net_forward.1} parent=1 // pred_region
      _
    $region37: #{neural_net_forward.1} parent=1 // pred_fallthru
      _
    %599 = vsyncpa [#allocation3], 1
    %600 = vsyncpa [#allocation5], 1

</llo_original>
